<compile_context>
chip_gen: v6e
topology: v6e:2x2x1
jax: 0.10.0
libtpu: 0.0.40
codegen_flags: <defaults>
</compile_context>

<pallas_src>
import math
import numpy as np

import jax
import jax.numpy as jnp
from jax.experimental import pallas as pl
from jax.experimental.pallas import tpu as pltpu


# ---------------------------------------------------------------------------
# Parameter / table construction (deterministic, mirrors the PyTorch __init__)
# ---------------------------------------------------------------------------

def sinusoid_pos_table(n_position, d_model):
    """PositionalEmbedding._get_sinusoid_encoding_table -> (n_position, d_model)."""
    pos = np.arange(n_position, dtype=np.float64)[:, None]
    j = np.arange(d_model, dtype=np.float64)[None, :]
    table = pos / np.power(10000.0, 2.0 * (np.floor(j / 2.0)) / d_model)
    table[:, 0::2] = np.sin(table[:, 0::2])
    table[:, 1::2] = np.cos(table[:, 1::2])
    return table.astype(np.float32)


def fixed_embedding_table(c_in, d_model):
    """FixedEmbedding weight (c_in, d_model)."""
    w = np.zeros((c_in, d_model), dtype=np.float64)
    position = np.arange(c_in, dtype=np.float64)[:, None]
    div_term = np.exp(np.arange(0, d_model, 2, dtype=np.float64)
                      * -(math.log(10000.0) / d_model))
    w[:, 0::2] = np.sin(position * div_term)
    w[:, 1::2] = np.cos(position * div_term)
    return w.astype(np.float32)


def token_conv_weight(key, c_in, d_model):
    """Conv1d weight (d_model, c_in, 3), kaiming_normal_(fan_in, leaky_relu)."""
    fan_in = c_in * 3
    gain = math.sqrt(2.0 / (1.0 + 0.01 ** 2))
    std = gain / math.sqrt(fan_in)
    return std * jax.random.normal(key, (d_model, c_in, 3), dtype=jnp.float32)


# freq='h' temporal vocab sizes and their row offsets inside the fused table
_HOUR, _WEEKDAY, _DAY, _MONTH = 24, 7, 32, 13
_TEMPORAL_ROWS = 128  # 24+7+32+13 = 76, padded to 128 for lane alignment


def init_data_embedding_params(key, c_in, d_model, n_position=1024):
    hour_t = fixed_embedding_table(_HOUR, d_model)
    wday_t = fixed_embedding_table(_WEEKDAY, d_model)
    day_t = fixed_embedding_table(_DAY, d_model)
    month_t = fixed_embedding_table(_MONTH, d_model)

    off_hour = 0
    off_wday = off_hour + _HOUR
    off_day = off_wday + _WEEKDAY
    off_month = off_day + _DAY
    fused = np.zeros((_TEMPORAL_ROWS, d_model), np.float32)
    fused[off_hour:off_hour + _HOUR] = hour_t
    fused[off_wday:off_wday + _WEEKDAY] = wday_t
    fused[off_day:off_day + _DAY] = day_t
    fused[off_month:off_month + _MONTH] = month_t

    conv_w = token_conv_weight(key, c_in, d_model)          # (d_model, c_in, 3)

    # Fused matmul rhs: [temporal table ; conv tap -1 ; tap 0 ; tap +1]
    # Row layout matches the in-kernel lhs = [counts | x[t-1] | x[t] | x[t+1]].
    w_taps = jnp.concatenate([conv_w[:, :, 0].T,            # multiplies x[t-1]
                              conv_w[:, :, 1].T,            # multiplies x[t]
                              conv_w[:, :, 2].T], axis=0)   # multiplies x[t+1]
    fused_rhs = jnp.concatenate([jnp.asarray(fused), w_taps], axis=0)

    return {
        "conv_w": conv_w,                                    # (d_model, c_in, 3)
        "pos_table": jnp.asarray(sinusoid_pos_table(n_position, d_model)),
        "hour_table": jnp.asarray(hour_t),
        "weekday_table": jnp.asarray(wday_t),
        "day_table": jnp.asarray(day_t),
        "month_table": jnp.asarray(month_t),
        "fused_rhs": fused_rhs,                              # (128 + 3*c_in, d_model) f32
        "temporal_offsets": (off_hour, off_wday, off_day, off_month),
    }


# ---------------------------------------------------------------------------
# Fused Pallas kernel
# ---------------------------------------------------------------------------

def data_embedding_kernel(x_ref, idx_ref, w_ref, pos_ref, o_ref):
    # x_ref   : (Bt, L, C)          value stream
    # idx_ref : (Bt, L, 4) int32    offsets into the fused temporal table rows
    # w_ref   : (T + 3*C, D)        fused rhs [temporal table; w_m1; w_0; w_p1]
    # pos_ref : (L, D) f32          sinusoidal positional slice (VMEM resident)
    # o_ref   : (Bt, L, D)
    bt, L, C = x_ref.shape
    D = o_ref.shape[-1]
    K = w_ref.shape[0]
    T = K - 3 * C
    rows = bt * L
    mxu_dtype = w_ref.dtype            # bf16 by default (wrapper decides)

    # ---- circular Conv1d(kernel=3, padding=1, bias=False) shifts (XLU) -----
    x0 = x_ref[...]                                  # (Bt, L, C)
    x_m1 = pltpu.roll(x0, 1, axis=1)                 # x[(t-1) % L]
    x_p1 = pltpu.roll(x0, L - 1, axis=1)             # x[(t+1) % L]

    # ---- TemporalEmbedding: one-hot "counts" over the fused 128-row table --
    # The four field lookups hit disjoint row ranges, so one 0/1 matrix times
    # the table equals the sum of 4 gathers.  Built directly in the MXU dtype
    # (0/1 exactly representable in bf16).
    idx = idx_ref[...]                               # (Bt, L, 4) int32
    iota = jax.lax.broadcasted_iota(jnp.int32, (bt, L, T), 2)
    counts = jnp.zeros((bt, L, T), mxu_dtype)
    for j in range(4):                               # hour, weekday, day, month
        counts = counts + (idx[:, :, j:j + 1] == iota).astype(mxu_dtype)

    # ---- single fused MXU matmul: conv (3 taps) + temporal lookup ----------
    lhs = jnp.concatenate(
        [counts.reshape(rows, T),
         x_m1.astype(mxu_dtype).reshape(rows, C),
         x0.astype(mxu_dtype).reshape(rows, C),
         x_p1.astype(mxu_dtype).reshape(rows, C)],
        axis=-1)                                     # (rows, T + 3*C)

    acc = jnp.dot(lhs, w_ref[...], preferred_element_type=jnp.float32)

    # ---- PositionalEmbedding add + store ------------------------------------
    out = acc.reshape(bt, L, D) + pos_ref[...]
    o_ref[...] = out.astype(o_ref.dtype)


# ---------------------------------------------------------------------------
# Tiling / VMEM sizing
# ---------------------------------------------------------------------------

def _round_up(v, m):
    return -(-v // m) * m


def _tpu_generation():
    """(physical VMEM bytes per TensorCore, TensorCores per chip)."""
    try:
        kind = jax.devices()[0].device_kind.lower()
    except Exception:
        kind = ""
    if "v7" in kind:
        return 64 << 20, 2
    if "v6" in kind or "trillium" in kind:
        return 128 << 20, 1
    if "v5 lite" in kind or "v5e" in kind or "v5litepod" in kind:
        return 128 << 20, 1
    # Unknown part: be conservative on VMEM and assume 2 cores share the grid.
    return 64 << 20, 2


def _block_bytes_per_step(bt, L, C, D, in_itemsize, out_itemsize):
    """Padded, double-buffered VMEM bytes for one grid step (upper-bound model:
    minor dims rounded up to 128 lanes, second-minor to 8 sublanes, x2 for the
    pipeline's double buffering, plus in-kernel intermediates)."""
    Lp = _round_up(L, 8)
    Cp = _round_up(C, 128)
    Dp = _round_up(D, 128)
    T = _TEMPORAL_ROWS
    K = T + 3 * C

    x_blk = bt * Lp * Cp * in_itemsize
    idx_blk = bt * Lp * 128 * 4
    out_blk = bt * Lp * Dp * out_itemsize
    rhs_blk = _round_up(K, 8) * Dp * 2               # bf16 fused rhs (resident)
    pos_blk = Lp * Dp * 4
    pipelined = 2 * (x_blk + idx_blk + out_blk + rhs_blk + pos_blk)

    rows = bt * Lp
    interm = (2 * bt * Lp * Cp * in_itemsize         # rolled copies of x
              + rows * _round_up(T, 128) * 2         # counts (bf16)
              + rows * _round_up(K, 128) * 2         # concatenated lhs (bf16)
              + rows * Dp * 4)                       # f32 accumulator / add
    return pipelined + interm


def _pick_batch_tile(B, L, C, D, in_itemsize, out_itemsize, budget, num_cores):
    """Largest Bt (divisor of B) fitting the padded-VMEM budget.  Only on
    multi-TensorCore parts (v7x) do we additionally keep >= num_cores grid
    steps so the 'parallel' axis feeds every core."""
    best = 1
    for cand in range(1, B + 1):
        if B % cand:
            continue
        steps = B // cand
        if num_cores > 1 and B >= num_cores and steps < num_cores:
            continue
        if _block_bytes_per_step(cand, L, C, D, in_itemsize, out_itemsize) > budget:
            continue
        best = max(best, cand)
    return best


# ---------------------------------------------------------------------------
# Forward wrapper
# ---------------------------------------------------------------------------

def data_embedding_forward(x, x_mark, params, *,
                           compute_dtype=jnp.float32,
                           out_dtype=jnp.float32,
                           mxu_bf16=True):
    """x: (B, L, c_in) f32, x_mark: (B, L, 4) int32 [month, day, weekday, hour]
    -> (B, L, d_model) in out_dtype."""
    B, L, c_in = x.shape
    d_model = params["fused_rhs"].shape[1]
    n_position = params["pos_table"].shape[0]
    assert L <= n_position, "PositionalEmbedding table only covers n_position rows"
    assert L % 8 == 0, "L must be a multiple of 8 (sublane tiling)"
    # NOTE: out-of-range x_mark values (e.g. hour >= 24) would silently alias
    # into the next field's rows of the fused table instead of failing like a
    # gather OOB; callers must pass in-range calendar features.
    # TODO(synk): lane-folding for d_model < 128 (masked vst otherwise); keep
    # d_model a multiple of 128 in production.

    in_itemsize = jnp.dtype(compute_dtype).itemsize
    out_itemsize = jnp.dtype(out_dtype).itemsize

    phys_vmem, num_cores = _tpu_generation()
    vmem_limit = int(phys_vmem * 0.75)               # ~48 MiB v7x, ~96 MiB v5e/v6e
    budget = int(vmem_limit * 0.8)

    Bt = _pick_batch_tile(B, L, c_in, d_model, in_itemsize, out_itemsize,
                          budget, num_cores)
    steps = B // Bt

    # --- tiny wrapper-side glue (no large HBM arrays are materialized) ------
    off_hour, off_wday, off_day, off_month = params["temporal_offsets"]
    idx = jnp.stack([
        x_mark[:, :, 3] + off_hour,     # hour
        x_mark[:, :, 2] + off_wday,     # weekday
        x_mark[:, :, 1] + off_day,      # day
        x_mark[:, :, 0] + off_month,    # month
    ], axis=-1).astype(jnp.int32)                     # (B, L, 4), lane-dense

    mxu_dtype = jnp.bfloat16 if mxu_bf16 else jnp.float32
    rhs = params["fused_rhs"].astype(mxu_dtype)       # (128 + 3*c_in, d_model)
    pos = params["pos_table"][:L]                     # (L, d_model) f32
    x_in = x.astype(compute_dtype)
    K = rhs.shape[0]

    out = pl.pallas_call(
        data_embedding_kernel,
        out_shape=jax.ShapeDtypeStruct((B, L, d_model), out_dtype),
        grid=(steps,),
        in_specs=[
            pl.BlockSpec((Bt, L, c_in), lambda b: (b, 0, 0)),      # x
            pl.BlockSpec((Bt, L, 4), lambda b: (b, 0, 0)),         # temporal idx
            pl.BlockSpec((K, d_model), lambda b: (0, 0)),          # fused rhs
            pl.BlockSpec((L, d_model), lambda b: (0, 0)),          # pos table
        ],
        out_specs=pl.BlockSpec((Bt, L, d_model), lambda b: (b, 0, 0)),
        compiler_params=pltpu.CompilerParams(
            dimension_semantics=("parallel",),
            vmem_limit_bytes=vmem_limit),
    )(x_in, idx, rhs, pos)

    # Dropout(p=0.1) in eval mode is identity.
    return out


# ---------------------------------------------------------------------------
# Pure-JAX reference (faithful to the PyTorch module) for verification
# ---------------------------------------------------------------------------

def data_embedding_ref(x, x_mark, params):
    B, L, c_in = x.shape
    xpad = jnp.concatenate([x[:, -1:, :], x, x[:, :1, :]], axis=1)  # circular pad
    w = params["conv_w"]  # (d_model, c_in, 3)
    conv = (jnp.einsum('blc,dc->bld', xpad[:, 0:L], w[:, :, 0])
            + jnp.einsum('blc,dc->bld', xpad[:, 1:L + 1], w[:, :, 1])
            + jnp.einsum('blc,dc->bld', xpad[:, 2:L + 2], w[:, :, 2]))
    temporal = (jnp.take(params["hour_table"], x_mark[:, :, 3], axis=0)
                + jnp.take(params["weekday_table"], x_mark[:, :, 2], axis=0)
                + jnp.take(params["day_table"], x_mark[:, :, 1], axis=0)
                + jnp.take(params["month_table"], x_mark[:, :, 0], axis=0))
    pos = params["pos_table"][:L][None]
    return conv + temporal + pos


if __name__ == "__main__":
    B, L, c_in, d_model = 2, 16, 7, 32

    params = init_data_embedding_params(jax.random.PRNGKey(0), c_in, d_model)

    key = jax.random.PRNGKey(0)
    kx, km, kd, kh, kw = jax.random.split(key, 5)
    x = jax.random.normal(kx, (B, L, c_in), dtype=jnp.float32)
    # x_mark columns: [month (0..12), day (0..31), weekday (0..6), hour (0..23)]
    month = jax.random.randint(km, (B, L, 1), 0, 13)
    day = jax.random.randint(kd, (B, L, 1), 0, 32)
    weekday = jax.random.randint(kw, (B, L, 1), 0, 7)
    hour = jax.random.randint(kh, (B, L, 1), 0, 24)
    x_mark = jnp.concatenate([month, day, weekday, hour], axis=-1).astype(jnp.int32)

    out = jax.block_until_ready(data_embedding_forward(x, x_mark, params))
    ref = data_embedding_ref(x, x_mark, params)

    assert out.shape == (B, L, d_model)
    # Tolerance covers the intentional bf16 MXU-operand rounding (f32
    # accumulation); structural errors (wrong conv tap / shift / table offset)
    # are O(0.1..1) and still caught.
    np.testing.assert_allclose(np.asarray(out), np.asarray(ref),
                               rtol=2e-2, atol=3e-2)
    print("KERNEL_OK")
</pallas_src>

<mosaic_0001>
module attributes {stable_mosaic.version = 11 : i64} {
  func.func @data_embedding_kernel(%arg0: i32, %arg1: memref<1x16x7xf32, #tpu.memory_space<vmem>>, %arg2: memref<1x16x4xi32, #tpu.memory_space<vmem>>, %arg3: memref<149x32xbf16, #tpu.memory_space<vmem>>, %arg4: memref<16x32xf32, #tpu.memory_space<vmem>>, %arg5: memref<1x16x32xf32, #tpu.memory_space<vmem>>) attributes {dimension_semantics = [#tpu.dimension_semantics<parallel>], iteration_bounds = array<i64: 2>, scalar_prefetch = 0 : i64, scratch_operands = 0 : i64, tpu.core_type = #tpu.core_type<tc>, window_params = [{transform_indices = @transform_0, window_bounds = array<i64: 1, 16, 7>}, {transform_indices = @transform_1, window_bounds = array<i64: 1, 16, 4>}, {pipeline_mode = #tpu.pipeline_mode<synchronous>, transform_indices = @transform_2, window_bounds = array<i64: 149, 32>}, {pipeline_mode = #tpu.pipeline_mode<synchronous>, transform_indices = @transform_3, window_bounds = array<i64: 16, 32>}, {transform_indices = @transform_4, window_bounds = array<i64: 1, 16, 32>}]} {
    %c0 = arith.constant 0 : index
    %c0_0 = arith.constant 0 : index
    %c0_1 = arith.constant 0 : index
    %0 = vector.load %arg1[%c0, %c0_0, %c0_1] : memref<1x16x7xf32, #tpu.memory_space<vmem>>, vector<1x16x7xf32>
    %c1_i32 = arith.constant 1 : i32
    %1 = tpu.dynamic_rotate %0 by %c1_i32 dim 1 : vector<1x16x7xf32>, i32 -> vector<1x16x7xf32>
    %c15_i32 = arith.constant 15 : i32
    %2 = tpu.dynamic_rotate %0 by %c15_i32 dim 1 : vector<1x16x7xf32>, i32 -> vector<1x16x7xf32>
    %c0_2 = arith.constant 0 : index
    %c0_3 = arith.constant 0 : index
    %c0_4 = arith.constant 0 : index
    %3 = vector.load %arg2[%c0_2, %c0_3, %c0_4] : memref<1x16x4xi32, #tpu.memory_space<vmem>>, vector<1x16x4xi32>
    %4 = tpu.iota {dimensions = array<i32: 2>} : vector<1x16x128xi32>
    %cst = arith.constant 0.000000e+00 : bf16
    %5 = vector.broadcast %cst : bf16 to vector<1x16x128xbf16>
    %6 = vector.extract_strided_slice %3 {offsets = [0, 0, 0], sizes = [1, 16, 1], strides = [1, 1, 1]} : vector<1x16x4xi32> to vector<1x16x1xi32>
    %7 = vector.broadcast %6 : vector<1x16x1xi32> to vector<1x16x128xi32>
    %8 = arith.cmpi eq, %7, %4 : vector<1x16x128xi32>
    %9 = arith.extui %8 : vector<1x16x128xi1> to vector<1x16x128xi32>
    %10 = arith.sitofp %9 : vector<1x16x128xi32> to vector<1x16x128xf32>
    %11 = arith.truncf %10 : vector<1x16x128xf32> to vector<1x16x128xbf16>
    %12 = arith.addf %5, %11 : vector<1x16x128xbf16>
    %13 = vector.extract_strided_slice %3 {offsets = [0, 0, 1], sizes = [1, 16, 1], strides = [1, 1, 1]} : vector<1x16x4xi32> to vector<1x16x1xi32>
    %14 = vector.broadcast %13 : vector<1x16x1xi32> to vector<1x16x128xi32>
    %15 = arith.cmpi eq, %14, %4 : vector<1x16x128xi32>
    %16 = arith.extui %15 : vector<1x16x128xi1> to vector<1x16x128xi32>
    %17 = arith.sitofp %16 : vector<1x16x128xi32> to vector<1x16x128xf32>
    %18 = arith.truncf %17 : vector<1x16x128xf32> to vector<1x16x128xbf16>
    %19 = arith.addf %12, %18 : vector<1x16x128xbf16>
    %20 = vector.extract_strided_slice %3 {offsets = [0, 0, 2], sizes = [1, 16, 1], strides = [1, 1, 1]} : vector<1x16x4xi32> to vector<1x16x1xi32>
    %21 = vector.broadcast %20 : vector<1x16x1xi32> to vector<1x16x128xi32>
    %22 = arith.cmpi eq, %21, %4 : vector<1x16x128xi32>
    %23 = arith.extui %22 : vector<1x16x128xi1> to vector<1x16x128xi32>
    %24 = arith.sitofp %23 : vector<1x16x128xi32> to vector<1x16x128xf32>
    %25 = arith.truncf %24 : vector<1x16x128xf32> to vector<1x16x128xbf16>
    %26 = arith.addf %19, %25 : vector<1x16x128xbf16>
    %27 = vector.extract_strided_slice %3 {offsets = [0, 0, 3], sizes = [1, 16, 1], strides = [1, 1, 1]} : vector<1x16x4xi32> to vector<1x16x1xi32>
    %28 = vector.broadcast %27 : vector<1x16x1xi32> to vector<1x16x128xi32>
    %29 = arith.cmpi eq, %28, %4 : vector<1x16x128xi32>
    %30 = arith.extui %29 : vector<1x16x128xi1> to vector<1x16x128xi32>
    %31 = arith.sitofp %30 : vector<1x16x128xi32> to vector<1x16x128xf32>
    %32 = arith.truncf %31 : vector<1x16x128xf32> to vector<1x16x128xbf16>
    %33 = arith.addf %26, %32 : vector<1x16x128xbf16>
    %34 = vector.shape_cast %33 : vector<1x16x128xbf16> to vector<16x128xbf16>
    %35 = arith.truncf %1 : vector<1x16x7xf32> to vector<1x16x7xbf16>
    %36 = vector.shape_cast %35 : vector<1x16x7xbf16> to vector<16x7xbf16>
    %37 = arith.truncf %0 : vector<1x16x7xf32> to vector<1x16x7xbf16>
    %38 = vector.shape_cast %37 : vector<1x16x7xbf16> to vector<16x7xbf16>
    %39 = arith.truncf %2 : vector<1x16x7xf32> to vector<1x16x7xbf16>
    %40 = vector.shape_cast %39 : vector<1x16x7xbf16> to vector<16x7xbf16>
    %41 = tpu.concatenate %34, %36, %38, %40 in 1 : vector<16x128xbf16>, vector<16x7xbf16>, vector<16x7xbf16>, vector<16x7xbf16> -> vector<16x149xbf16>
    %c0_5 = arith.constant 0 : index
    %c0_6 = arith.constant 0 : index
    %42 = vector.load %arg3[%c0_5, %c0_6] : memref<149x32xbf16, #tpu.memory_space<vmem>>, vector<149x32xbf16>
    %cst_7 = arith.constant dense<0.000000e+00> : vector<16x32xf32>
    %43 = tpu.matmul %41, %42, %cst_7 {dimension_numbers = #tpu.dot_dimension_numbers<[1], [0], [0], [1], [0, 0, 1, 1], [], []>} : vector<16x149xbf16>, vector<149x32xbf16>, vector<16x32xf32> -> vector<16x32xf32>
    %44 = vector.shape_cast %43 : vector<16x32xf32> to vector<1x16x32xf32>
    %c0_8 = arith.constant 0 : index
    %c0_9 = arith.constant 0 : index
    %45 = vector.load %arg4[%c0_8, %c0_9] : memref<16x32xf32, #tpu.memory_space<vmem>>, vector<16x32xf32>
    %46 = vector.shape_cast %45 : vector<16x32xf32> to vector<1x16x32xf32>
    %47 = arith.addf %44, %46 : vector<1x16x32xf32>
    %c0_10 = arith.constant 0 : index
    %c0_11 = arith.constant 0 : index
    %c0_12 = arith.constant 0 : index
    %48 = vector.load %arg5[%c0_10, %c0_11, %c0_12] : memref<1x16x32xf32, #tpu.memory_space<vmem>>, vector<1x16x32xf32>
    tpu.vector_store %arg5[%c0_10, %c0_11, %c0_12], %47 {strides = array<i32>} : memref<1x16x32xf32, #tpu.memory_space<vmem>>, vector<1x16x32xf32>,
    return
  }
  func.func @transform_0(%arg0: i32) -> (i32, i32, i32) {
    %c0_i32 = arith.constant 0 : i32
    %c0_i32_0 = arith.constant 0 : i32
    %c0_i32_1 = arith.constant 0 : i32
    return %arg0, %c0_i32, %c0_i32_0 : i32, i32, i32
  }
  func.func @transform_1(%arg0: i32) -> (i32, i32, i32) {
    %c0_i32 = arith.constant 0 : i32
    %c0_i32_0 = arith.constant 0 : i32
    %c0_i32_1 = arith.constant 0 : i32
    return %arg0, %c0_i32, %c0_i32_0 : i32, i32, i32
  }
  func.func @transform_2(%arg0: i32) -> (i32, i32) {
    %c0_i32 = arith.constant 0 : i32
    %c0_i32_0 = arith.constant 0 : i32
    %c0_i32_1 = arith.constant 0 : i32
    return %c0_i32, %c0_i32_0 : i32, i32
  }
  func.func @transform_3(%arg0: i32) -> (i32, i32) {
    %c0_i32 = arith.constant 0 : i32
    %c0_i32_0 = arith.constant 0 : i32
    %c0_i32_1 = arith.constant 0 : i32
    return %c0_i32, %c0_i32_0 : i32, i32
  }
  func.func @transform_4(%arg0: i32) -> (i32, i32, i32) {
    %c0_i32 = arith.constant 0 : i32
    %c0_i32_0 = arith.constant 0 : i32
    %c0_i32_1 = arith.constant 0 : i32
    return %arg0, %c0_i32, %c0_i32_0 : i32, i32, i32
  }
}

</mosaic_0001>

<llo_original>
// kernel: tpu_custom_call.1
$region0: #{tpu_custom_call.1}
  #allocation0 [shape = 'u32[]', space=smem, size = 0x4, offset = 0x4, fixed_abs, tag = 'smem constant byte address 0x4 - core index']
  #allocation1 [shape = 'u32[144,128]{1,0:T(1,128)}', space=vmem, size = 0x12000, scoped, tag = 'internal scratch']
  %s0 = inlined_call_operand.vmem [shape: f32[2,16,7], index: 0, kind: input, shape index: {}]
  %s1 = inlined_call_operand.vmem [shape: s32[2,16,4], index: 1, kind: input, shape index: {}]
  %s2 = inlined_call_operand.vmem [shape: bf16[149,32], index: 2, kind: input, shape index: {}]
  %s3 = inlined_call_operand.vmem [shape: f32[16,32], index: 3, kind: input, shape index: {}]
  %s4 = inlined_call_operand.hbm [shape: f32[2,16,32], index: 4, kind: output, shape index: {}]
  %s5 = sld [smem:[#allocation0]]
  $region49: #{tpu_custom_call.1} parent=0
    _
  %s7 = ssub.s32 1, %s5
  %s8 = scalar_select 0, %s7, %s5
  $region1: #{tpu_custom_call.1} parent=0
    #allocation2 [shape = 'u8[16384]{0}', space=vmem, size = 0x4000, scoped, tag = 'output window, operand 0']
    #allocation3 [shape = 's32[2]{0}', space=sflag, size = 0x8, scoped, tag = 'scoped memory for tpu_custom_call.1']
    %9 = vsyncpa [#allocation3], 0
    %s10 = scalar_lea.sflag [#allocation3], 1
    %11 = vsyncpa %s10, 0
    loop: start=0, step=1, limit=4
    $region2: #{tpu_custom_call.1} parent=1 // loop_pre_header
      _
    $region3: #{tpu_custom_call.1} parent=1 // loop_header
      %s13 = sphi 0, %s17
      %p14 = scmp.ge.s32.totalorder %s13, 4
      %s23 = sphi 0, %s25
      %s26 = sphi 0, %s23
      %s27 = sphi 0, %s26
      %s43 = sphi 0, %s27
      %s49 = sphi 0, %s51
      %s52 = sphi 0, %s49
      %s53 = sphi 0, %s52
      %s69 = sphi 0, %s53
      %s73 = sphi 0, %s73
      %s75 = sphi 0, %s73
      %s76 = sphi 0, %s75
      %s90 = sphi 0, %s76
      %s94 = sphi 0, %s94
      %s96 = sphi 0, %s94
      %s97 = sphi 0, %s96
      %s111 = sphi 0, %s97
      %s117 = sphi 0, %s119
      %s120 = sphi 0, %s117
      %s121 = sphi 0, %s120
      %s137 = sphi 0, %s121
    $region4: #{tpu_custom_call.1} parent=1 // loop_header_branch
      %16 = sbr.rel (%p14) target = $region8
    $region5: #{tpu_custom_call.1} parent=1 // loop_body
      %s18 = ssub.s32 %s13, 1
      %s19 = ssub.s32 %s13, 2
      %s20 = sadd.s32 %s13, 1
      %s21 = ssub.s32 %s13, %s20
      %p22 = scmp.eq.s32.totalorder %s21, 0
      %s24 = sadd.s32 %s23, 1
      %s25 = scalar_select %p22, %s23, %s24
      %p28 = pneg %p22
      %p29 = scmp.eq.s32.totalorder %s13, 1
      %p30 = por %p28, %p29
      %p31 = scmp.ne.s32.totalorder %s23, %s26
      %p32 = scmp.eq.s32.totalorder %s13, 0
      %p33 = por %p31, %p32
      %p34 = scmp.ne.s32.totalorder %s23, %s26
      %p35 = scmp.eq.s32.totalorder %s18, 1
      %p36 = por %p34, %p35
      %p37 = scmp.ne.s32.totalorder %s26, %s27
      %p38 = scmp.eq.s32.totalorder %s18, 0
      %p39 = por %p37, %p38
      %p40 = scmp.ne.s32.totalorder %s26, %s27
      %p41 = scmp.eq.s32.totalorder %s19, 1
      %p42 = por %p40, %p41
      %p44 = scmp.ne.s32.totalorder %s27, %s43
      %p45 = scmp.eq.s32.totalorder %s19, 0
      %p46 = por %p44, %p45
      %s47 = ssub.s32 %s13, %s20
      %p48 = scmp.eq.s32.totalorder %s47, 0
      %s50 = sadd.s32 %s49, 1
      %s51 = scalar_select %p48, %s49, %s50
      %p54 = pneg %p48
      %p55 = scmp.eq.s32.totalorder %s13, 1
      %p56 = por %p54, %p55
      %p57 = scmp.ne.s32.totalorder %s49, %s52
      %p58 = scmp.eq.s32.totalorder %s13, 0
      %p59 = por %p57, %p58
      %p60 = scmp.ne.s32.totalorder %s49, %s52
      %p61 = scmp.eq.s32.totalorder %s18, 1
      %p62 = por %p60, %p61
      %p63 = scmp.ne.s32.totalorder %s52, %s53
      %p64 = scmp.eq.s32.totalorder %s18, 0
      %p65 = por %p63, %p64
      %p66 = scmp.ne.s32.totalorder %s52, %s53
      %p67 = scmp.eq.s32.totalorder %s19, 1
      %p68 = por %p66, %p67
      %p70 = scmp.ne.s32.totalorder %s53, %s69
      %p71 = scmp.eq.s32.totalorder %s19, 0
      %p72 = por %p70, %p71
      %s74 = sadd.s32 %s73, 1
      %p77 = scmp.eq.s32.totalorder %s13, 1
      %p78 = scmp.ne.s32.totalorder %s73, %s75
      %p79 = scmp.eq.s32.totalorder %s13, 0
      %p80 = por %p78, %p79
      %p81 = scmp.ne.s32.totalorder %s73, %s75
      %p82 = scmp.eq.s32.totalorder %s18, 1
      %p83 = por %p81, %p82
      %p84 = scmp.ne.s32.totalorder %s75, %s76
      %p85 = scmp.eq.s32.totalorder %s18, 0
      %p86 = por %p84, %p85
      %p87 = scmp.ne.s32.totalorder %s75, %s76
      %p88 = scmp.eq.s32.totalorder %s19, 1
      %p89 = por %p87, %p88
      %p91 = scmp.ne.s32.totalorder %s76, %s90
      %p92 = scmp.eq.s32.totalorder %s19, 0
      %p93 = por %p91, %p92
      %s95 = sadd.s32 %s94, 1
      %p98 = scmp.eq.s32.totalorder %s13, 1
      %p99 = scmp.ne.s32.totalorder %s94, %s96
      %p100 = scmp.eq.s32.totalorder %s13, 0
      %p101 = por %p99, %p100
      %p102 = scmp.ne.s32.totalorder %s94, %s96
      %p103 = scmp.eq.s32.totalorder %s18, 1
      %p104 = por %p102, %p103
      %p105 = scmp.ne.s32.totalorder %s96, %s97
      %p106 = scmp.eq.s32.totalorder %s18, 0
      %p107 = por %p105, %p106
      %p108 = scmp.ne.s32.totalorder %s96, %s97
      %p109 = scmp.eq.s32.totalorder %s19, 1
      %p110 = por %p108, %p109
      %p112 = scmp.ne.s32.totalorder %s97, %s111
      %p113 = scmp.eq.s32.totalorder %s19, 0
      %p114 = por %p112, %p113
      %s115 = ssub.s32 %s13, %s20
      %p116 = scmp.eq.s32.totalorder %s115, 0
      %s118 = sadd.s32 %s117, 1
      %s119 = scalar_select %p116, %s117, %s118
      %p122 = pneg %p116
      %p123 = scmp.eq.s32.totalorder %s13, 1
      %p124 = por %p122, %p123
      %p125 = scmp.ne.s32.totalorder %s117, %s120
      %p126 = scmp.eq.s32.totalorder %s13, 0
      %p127 = por %p125, %p126
      %p128 = scmp.ne.s32.totalorder %s117, %s120
      %p129 = scmp.eq.s32.totalorder %s18, 1
      %p130 = por %p128, %p129
      %p131 = scmp.ne.s32.totalorder %s120, %s121
      %p132 = scmp.eq.s32.totalorder %s18, 0
      %p133 = por %p131, %p132
      %p134 = scmp.ne.s32.totalorder %s120, %s121
      %p135 = scmp.eq.s32.totalorder %s19, 1
      %p136 = por %p134, %p135
      %p138 = scmp.ne.s32.totalorder %s121, %s137
      %p139 = scmp.eq.s32.totalorder %s19, 0
      %p140 = por %p138, %p139
      %p141 = scmp.le.s32.totalorder 1, %s13
      %p142 = scmp.lt.s32.totalorder %s13, 3
      %p143 = pnand %p141, %p142
      %p144 = pneg %p143
      // Predicated region
      $region9: #{tpu_custom_call.1} parent=5 // pred_check
        _
      $region10: #{tpu_custom_call.1} parent=5 // pred_check_branch
        %146 = sbr.rel (%p143) target = $region12
      $region11: #{tpu_custom_call.1} parent=5 // pred_region
        %s147 = ssub.s32 %s13, 1
        // Predicated region
        $region13: #{tpu_custom_call.1} parent=11 // pred_check
          %p148 = pneg %p86
        $region14: #{tpu_custom_call.1} parent=11 // pred_check_branch
          %150 = sbr.rel (%p148) target = $region16
        $region15: #{tpu_custom_call.1} parent=11 // pred_region
          _
        $region16: #{tpu_custom_call.1} parent=11 // pred_fallthru
          _
        // Predicated region
        $region17: #{tpu_custom_call.1} parent=11 // pred_check
          %p151 = pneg %p107
        $region18: #{tpu_custom_call.1} parent=11 // pred_check_branch
          %153 = sbr.rel (%p151) target = $region20
        $region19: #{tpu_custom_call.1} parent=11 // pred_region
          _
        $region20: #{tpu_custom_call.1} parent=11 // pred_fallthru
          _
      $region12: #{tpu_custom_call.1} parent=5 // pred_fallthru
        _
      %p154 = scmp.lt.s32.totalorder %s13, 2
      // Predicated region
      $region21: #{tpu_custom_call.1} parent=5 // pred_check
        %p155 = pneg %p154
      $region22: #{tpu_custom_call.1} parent=5 // pred_check_branch
        %157 = sbr.rel (%p155) target = $region24
      $region23: #{tpu_custom_call.1} parent=5 // pred_region
        // Predicated region
        $region25: #{tpu_custom_call.1} parent=23 // pred_check
          %p158 = pneg %p33
        $region26: #{tpu_custom_call.1} parent=23 // pred_check_branch
          %160 = sbr.rel (%p158) target = $region28
        $region27: #{tpu_custom_call.1} parent=23 // pred_region
          %p161 = scmp.lt.s32.totalorder %s13, 1
          %s162 = scalar_select %p161, %s13, 1
          %s163 = smul.addr %s162, 2
          %s164 = smul.addr %s163, 8
          %s165 = scalar_lea.vmem %s0, %s164
        $region28: #{tpu_custom_call.1} parent=23 // pred_fallthru
          _
        // Predicated region
        $region29: #{tpu_custom_call.1} parent=23 // pred_check
          %p166 = pneg %p59
        $region30: #{tpu_custom_call.1} parent=23 // pred_check_branch
          %168 = sbr.rel (%p166) target = $region32
        $region31: #{tpu_custom_call.1} parent=23 // pred_region
          %p169 = scmp.lt.s32.totalorder %s13, 1
          %s170 = scalar_select %p169, %s13, 1
          %s171 = smul.addr %s170, 2
          %s172 = smul.addr %s171, 8
          %s173 = scalar_lea.vmem %s1, %s172
        $region32: #{tpu_custom_call.1} parent=23 // pred_fallthru
          _
      $region24: #{tpu_custom_call.1} parent=5 // pred_fallthru
        _
      %p174 = scmp.le.s32.totalorder 1, %s13
      %p175 = scmp.lt.s32.totalorder %s13, 3
      %p176 = pnand %p174, %p175
      %p177 = pneg %p176
      // Predicated region
      $region33: #{tpu_custom_call.1} parent=5 // pred_check
        _
      $region34: #{tpu_custom_call.1} parent=5 // pred_check_branch
        %179 = sbr.rel (%p176) target = $region36
      $region35: #{tpu_custom_call.1} parent=5 // pred_region
        %s180 = ssub.s32 %s13, 1
        %p181 = scmp.lt.s32.totalorder %s18, 1
        %s182 = scalar_select %p181, %s18, 1
        %s183 = smul.addr %s182, 2
        %s184 = smul.addr %s183, 8
        %s185 = scalar_lea.vmem %s0, %s184
        %p186 = pneg %p39
        %p187 = pneg %p36
        %p188 = scmp.lt.s32.totalorder %s18, 1
        %s189 = scalar_select %p188, %s18, 1
        %s190 = smul.addr %s189, 2
        %s191 = smul.addr %s190, 8
        %s192 = scalar_lea.vmem %s1, %s191
        %p193 = pneg %p65
        %p194 = pneg %p62
        %p195 = pneg %p86
        %p196 = pneg %p83
        %p197 = pneg %p107
        %p198 = pneg %p104
        %p199 = pneg %p133
        %p200 = pneg %p130
        %s201 = sand.u32 %s120, 1
        %s202 = scalar_lea.sflag [#allocation3], %s201
        %s203 = sand.u32 %s120, 1
        %s204 = smul.addr %s203, 16
        %s205 = scalar_lea.vmem [#allocation2], %s204
        %p206 = scmp.lt.s32.totalorder %s18, 1
        %s207 = scalar_select %p206, %s18, 1
        %s208 = smul.addr %s207, 2
        %s209 = smul.addr %s208, 8
        %s210 = scalar_lea.vmem %s0, %s209
        %p211 = scmp.lt.s32.totalorder %s18, 1
        %s212 = scalar_select %p211, %s18, 1
        %s213 = smul.addr %s212, 2
        %s214 = smul.addr %s213, 8
        %s215 = scalar_lea.vmem %s1, %s214
        %v217 = vld [vmem:[%s210] sm:$0xff]
        %v218 = vld [vmem:[%s210 + $0x8] sm:$0xff]
        %v219 = vrot.slane %v217, 7
        %v220 = vrot.slane %v218, 7
        %v221 = vlaneseq
        %v222 = vshrl.u32 %v221, 7
        %vm223 = vcmp.lt.s32.totalorder %v222, 1
        %v224 = vsel %vm223, %v219, %v220
        %v225 = vsel %vm223, %v220, %v219
        %v226 = vrot.slane %v217, 1
        %v227 = vrot.slane %v218, 1
        %vm228 = vcmp.lt.s32.totalorder %v222, 7
        %v229 = vsel %vm228, %v226, %v227
        %v230 = vsel %vm228, %v227, %v226
        %v231 = vld [vmem:[%s215] sm:$0xff]
        %v232 = vld [vmem:[%s215 + $0x8] sm:$0xff]
        %v233 = vlaneseq
        %v234 = vand.u32 %v233, 127
        %235 = vset.pattern.permute.xlu0 0
        %236 = vperm.xlu0 %235, %v231
        %v237 = vpop.permute.xlu0 %236
        %238 = vset.pattern.permute.xlu0 0
        %239 = vperm.xlu0 %238, %v232
        %v240 = vpop.permute.xlu0 %239
        %vm241 = vcmp.eq.s32.totalorder %v237, %v234
        %vm242 = vcmp.eq.s32.totalorder %v240, %v234
        %v243 = vsel %vm241, 1, 0
        %v244 = vsel %vm242, 1, 0
        %v245 = vcvt.s32.f32 %v243
        %v246 = vcvt.s32.f32 %v244
        %v247 = vpack.c.bf16 %v246, %v245
        %v248 = vadd.bf16 %v247, 0
        %249 = vset.pattern.permute.xlu0 1
        %250 = vperm.xlu0 %249, %v231
        %v251 = vpop.permute.xlu0 %250
        %252 = vset.pattern.permute.xlu0 1
        %253 = vperm.xlu0 %252, %v232
        %v254 = vpop.permute.xlu0 %253
        %vm255 = vcmp.eq.s32.totalorder %v251, %v234
        %vm256 = vcmp.eq.s32.totalorder %v254, %v234
        %v257 = vsel %vm255, 1, 0
        %v258 = vsel %vm256, 1, 0
        %v259 = vcvt.s32.f32 %v257
        %v260 = vcvt.s32.f32 %v258
        %v261 = vpack.c.bf16 %v260, %v259
        %v262 = vadd.bf16 %v248, %v261
        %263 = vset.pattern.permute.xlu0 2
        %264 = vperm.xlu0 %263, %v231
        %v265 = vpop.permute.xlu0 %264
        %266 = vset.pattern.permute.xlu0 2
        %267 = vperm.xlu0 %266, %v232
        %v268 = vpop.permute.xlu0 %267
        %vm269 = vcmp.eq.s32.totalorder %v265, %v234
        %vm270 = vcmp.eq.s32.totalorder %v268, %v234
        %v271 = vsel %vm269, 1, 0
        %v272 = vsel %vm270, 1, 0
        %v273 = vcvt.s32.f32 %v271
        %v274 = vcvt.s32.f32 %v272
        %v275 = vpack.c.bf16 %v274, %v273
        %v276 = vadd.bf16 %v262, %v275
        %277 = vset.pattern.permute.xlu0 3
        %278 = vperm.xlu0 %277, %v231
        %v279 = vpop.permute.xlu0 %278
        %280 = vset.pattern.permute.xlu0 3
        %281 = vperm.xlu0 %280, %v232
        %v282 = vpop.permute.xlu0 %281
        %vm283 = vcmp.eq.s32.totalorder %v279, %v234
        %vm284 = vcmp.eq.s32.totalorder %v282, %v234
        %v285 = vsel %vm283, 1, 0
        %v286 = vsel %vm284, 1, 0
        %v287 = vcvt.s32.f32 %v285
        %v288 = vcvt.s32.f32 %v286
        %v289 = vpack.c.bf16 %v288, %v287
        %v290 = vadd.bf16 %v276, %v289
        %v291 = vpack.c.bf16 %v224, %v225
        %v292 = vpack.c.bf16 %v218, %v217
        %v293 = vpack.c.bf16 %v230, %v229
        %295 = vrot.lane.b32.xlu0 %v292, 7
        %v296 = vpop.permute.xlu0 %295
        %298 = vrot.lane.b32.xlu0 %v293, 14
        %v299 = vpop.permute.xlu0 %298
        %vm300 = vcmask 56320
        %v303 = vsel %vm300, %v291, %v296
        %vm304 = vcmask 113664
        %v306 = vsel %vm304, %v303, %v299
        %v307 = vld [vmem:[%s2] sm:$0xf]
        %v308 = vld [vmem:[%s2 + $0x4] sm:$0xf]
        %v309 = vld [vmem:[%s2 + $0x8] sm:$0xf]
        %v310 = vld [vmem:[%s2 + $0xc] sm:$0xf]
        %v311 = vld [vmem:[%s2 + $0x10] sm:$0xf]
        %v312 = vld [vmem:[%s2 + $0x14] sm:$0xf]
        %v313 = vld [vmem:[%s2 + $0x18] sm:$0xf]
        %v314 = vld [vmem:[%s2 + $0x1c] sm:$0xf]
        %v315 = vld [vmem:[%s2 + $0x20] sm:$0xf]
        %v316 = vld [vmem:[%s2 + $0x24] sm:$0xf]
        %v317 = vld [vmem:[%s2 + $0x28] sm:$0xf]
        %v318 = vld [vmem:[%s2 + $0x2c] sm:$0xf]
        %v319 = vld [vmem:[%s2 + $0x30] sm:$0xf]
        %v320 = vld [vmem:[%s2 + $0x34] sm:$0xf]
        %v321 = vld [vmem:[%s2 + $0x38] sm:$0xf]
        %v322 = vld [vmem:[%s2 + $0x3c] sm:$0xf]
        %v323 = vld [vmem:[%s2 + $0x40] sm:$0xf]
        %v324 = vld [vmem:[%s2 + $0x44] sm:$0xf]
        %v325 = vld [vmem:[%s2 + $0x48] sm:$0x7]
        %v345 = vunpack.c.l.b16 %v307
        %v346 = vunpack.c.l.b16 %v308
        %v347 = vunpack.c.l.b16 %v309
        %v348 = vunpack.c.l.b16 %v310
        %v349 = vunpack.c.l.b16 %v311
        %v350 = vunpack.c.l.b16 %v312
        %v351 = vunpack.c.l.b16 %v313
        %v352 = vunpack.c.l.b16 %v314
        %v353 = vunpack.c.l.b16 %v315
        %v354 = vunpack.c.l.b16 %v316
        %v355 = vunpack.c.l.b16 %v317
        %v356 = vunpack.c.l.b16 %v318
        %v357 = vunpack.c.l.b16 %v319
        %v358 = vunpack.c.l.b16 %v320
        %v359 = vunpack.c.l.b16 %v321
        %v360 = vunpack.c.l.b16 %v322
        %v361 = vunpack.c.l.b16 %v323
        %v362 = vunpack.c.l.b16 %v324
        %v363 = vunpack.c.l.b16 %v325
        %v364 = vpack.c.b16 %v346, %v345
        %v365 = vpack.c.b16 %v348, %v347
        %v366 = vpack.c.b16 %v350, %v349
        %v367 = vpack.c.b16 %v352, %v351
        %v368 = vpack.c.b16 %v354, %v353
        %v369 = vpack.c.b16 %v356, %v355
        %v370 = vpack.c.b16 %v358, %v357
        %v371 = vpack.c.b16 %v360, %v359
        %v372 = vpack.c.b16 %v362, %v361
        %v373 = vpack.c.b16 %v363, %v363
        %vm383 = vcmask 171008
        %v384 = vsel %vm383, %v306, 0
        %vm386 = vcmask 1041408
        %vm387 = vcmask 1042432
        %v388 = vsel %vm386, 4294967295, 65535
        %v389 = vsel %vm387, %v388, 0
        %v391 = vand.u32 %v373, %v389
        %393 = vmatprep.subr.bf16.mxu0 0
        %394 = vmatpush1.bf16.msra.mxu0 %v371
        %395 = vmatprep.subr.bf16.mxu0 0
        %396 = vmatpush1.bf16.msra.mxu0 %v370
        %397 = vmatprep.subr.bf16.mxu0 0
        %398 = vmatpush1.bf16.msra.mxu0 %v369
        %399 = vmatprep.subr.bf16.mxu0 0
        %400 = vmatpush1.bf16.msra.mxu0 %v368
        %401 = vmatprep.subr.bf16.mxu0 0
        %402 = vmatpush1.bf16.msra.mxu0 %v367
        %403 = vmatprep.subr.bf16.mxu0 0
        %404 = vmatpush1.bf16.msra.mxu0 %v366
        %405 = vmatprep.subr.bf16.mxu0 0
        %406 = vmatpush1.bf16.msra.mxu0 %v365
        %407 = vmatprep.subr.bf16.mxu0 0
        %408 = vmatpush1.bf16.msra.mxu0 %v364
        %409 = vmatprep.subr.bf16.mxu0 0
        %410 = vmatpush2.bf16.msra.mxu0 0
        %411 = vmatprep.subr.bf16.mxu0 0
        %412 = vmatpush2.bf16.msra.mxu0 0
        %413 = vmatprep.subr.bf16.mxu0 0
        %414 = vmatpush2.bf16.msra.mxu0 0
        %415 = vmatprep.subr.bf16.mxu0 0
        %416 = vmatpush2.bf16.msra.mxu0 0
        %417 = vmatprep.subr.bf16.mxu0 0
        %418 = vmatpush2.bf16.msra.mxu0 0
        %419 = vmatprep.subr.bf16.mxu0 0
        %420 = vmatpush2.bf16.msra.mxu0 0
        %421 = vmatprep.subr.bf16.mxu0 0
        %422 = vmatpush2.bf16.msra.mxu0 %v391
        %423 = vmatprep.subr.bf16.mxu0 0
        %424 = vmatpush2.bf16.msra.mxu0 %v372
        %425 = vmatprep.mubr.bf16.mxu0 %v384
        %426 = vmatmul.mubr.bf16.gmra.mxu0 %v290
        %v427 = vpop.f32.mrf.mxu0
        %v428 = vadd.f32 0.0, %v427
        %v429 = vpop.f32.mrf.mxu0
        %v430 = vpop.f32.mrf.mxu0
        %v431 = vadd.f32 0.0, %v430
        %v432 = vpop.f32.mrf.mxu0
        %433 = vdwg.mxu0
        %v434 = vld [vmem:[%s3] sm:$0xff]
        %v435 = vld [vmem:[%s3 + $0x8] sm:$0xff]
        %v436 = vadd.f32 %v428, %v434
        %v437 = vadd.f32 %v431, %v435
        %vm438 = vcmask 261120
        %439 = vst.msk [vmem:[%s205] sm:$0xff] %vm438, %v436
        %440 = vst.msk [vmem:[%s205 + $0x8] sm:$0xff] %vm438, %v437
        %s441 = sand.u32 %s120, 1
        %s442 = scalar_lea.sflag [#allocation3], %s441
        %s443 = sand.u32 %s120, 1
        %s444 = smul.addr %s443, 16
        %s445 = scalar_lea.vmem [#allocation2], %s444
        // Predicated region
        $region37: #{tpu_custom_call.1} parent=35 // pred_check
          %p446 = pneg %p130
        $region38: #{tpu_custom_call.1} parent=35 // pred_check_branch
          %448 = sbr.rel (%p446) target = $region40
        $region39: #{tpu_custom_call.1} parent=35 // pred_region
          %s450 = ssub.s32 256, 256
          %451 = vsyncadd %s442, %s450
          %s452 = smul.addr %s18, 2
          %s453 = smul.addr %s452, 128
          %s454 = scalar_lea.hbm %s4, %s453
          %s455 = sshll.u32 %s445, 4
          %s456 = int_to_ptr.vmem [resolvable:$true] %s455
          %461 = dma.vmem_to_hbm [thread:$0]  %s456, 256, %s454, %s442, 128, 128, 8
        $region40: #{tpu_custom_call.1} parent=35 // pred_fallthru
          _
      $region36: #{tpu_custom_call.1} parent=5 // pred_fallthru
        _
      %p462 = scmp.le.s32.totalorder 2, %s13
      // Predicated region
      $region41: #{tpu_custom_call.1} parent=5 // pred_check
        %p463 = pneg %p462
      $region42: #{tpu_custom_call.1} parent=5 // pred_check_branch
        %465 = sbr.rel (%p463) target = $region44
      $region43: #{tpu_custom_call.1} parent=5 // pred_region
        %s466 = ssub.s32 %s13, 2
        // Predicated region
        $region45: #{tpu_custom_call.1} parent=43 // pred_check
          %p467 = pneg %p136
        $region46: #{tpu_custom_call.1} parent=43 // pred_check_branch
          %469 = sbr.rel (%p467) target = $region48
        $region47: #{tpu_custom_call.1} parent=43 // pred_region
          %s470 = sand.u32 %s121, 1
          %s471 = scalar_lea.sflag [#allocation3], %s470
          %s472 = sand.u32 %s121, 1
          %s473 = smul.addr %s472, 16
          %s474 = scalar_lea.vmem [#allocation2], %s473
          %475 = dma.done %s471, 256
        $region48: #{tpu_custom_call.1} parent=43 // pred_fallthru
          _
      $region44: #{tpu_custom_call.1} parent=5 // pred_fallthru
        _
    $region6: #{tpu_custom_call.1} parent=1 // loop_footer
      %s17 = sadd.s32 1, %s13
    $region7: #{tpu_custom_call.1} parent=1 // loop_footer_branch
      %12 = sbr.rel target = $region3
    $region8: #{tpu_custom_call.1} parent=1 // loop_exit
      _
    %476 = vsyncpa [#allocation3], 1
    %s477 = scalar_lea.sflag [#allocation3], 1
    %478 = vsyncpa %s477, 1

</llo_original>
